<compile_context>
chip_gen: v5e
topology: v5e:2x2
jax: 0.10.0
libtpu: 0.0.40
codegen_flags: <defaults>
</compile_context>

<pallas_src>
import jax
import jax.numpy as jnp
from jax.experimental import pallas as pl
from jax.experimental.pallas import tpu as pltpu


def _make_index_copy_kernel(num_inputs: int):
    """Kernel: DMA-copy the selected HBM input straight to the HBM output."""

    def kernel(idx_ref, *refs):
        x_refs = refs[:num_inputs]
        o_ref = refs[num_inputs]
        sem = refs[num_inputs + 1]
        idx = idx_ref[0]

        def _copy_branch(k):
            def _branch():
                cp = pltpu.make_async_copy(x_refs[k], o_ref, sem)
                cp.start()
                cp.wait()
            return _branch

        # Static Python loop over the (tiny) list; at runtime exactly one pl.when branch
        # fires, so exactly one tensor is read and one tensor is written (HBM -> HBM,
        # no VMEM staging, no vld/vst slots, no per-grid-step overhead).
        for k in range(num_inputs):
            pl.when(idx == k)(_copy_branch(k))

    return kernel


def index_select(xs, index):
    """Pallas implementation of `Index.forward`: returns xs[index].

    xs: list/tuple of arrays.
    index: Python int (static fast path, no kernel) or an int scalar array / traced value
           (on-device selection via scalar prefetch + guarded HBM->HBM DMA).
    """
    xs = list(xs)
    K = len(xs)

    # Static fast path: the ultralytics module almost always has a compile-time constant
    # index, where plain list indexing is free (zero HBM traffic, zero launch overhead).
    if isinstance(index, int):
        return xs[index]

    shape = xs[0].shape
    dtype = xs[0].dtype
    if any(x.shape != shape or x.dtype != dtype for x in xs):
        # TODO(synk): a traced index over tensors of *different* shapes/dtypes has no static
        # output shape; only Python-level (static-index) selection is meaningful there.
        raise ValueError("dynamic index_select requires all list entries to share shape/dtype")

    nbytes = jnp.dtype(dtype).itemsize
    for d in shape:
        nbytes *= d

    # Normalize the index (PyTorch-style negative indices allowed, prevents OOB DMA).
    idx = (jnp.asarray(index, dtype=jnp.int32) % jnp.int32(K)).reshape((1,))

    return pl.pallas_call(
        _make_index_copy_kernel(K),
        out_shape=jax.ShapeDtypeStruct(shape, dtype),
        grid_spec=pltpu.PrefetchScalarGridSpec(
            num_scalar_prefetch=1,
            grid=(1,),
            in_specs=[pl.BlockSpec(memory_space=pl.ANY)] * K,   # raw HBM refs, no auto-DMA
            out_specs=pl.BlockSpec(memory_space=pl.ANY),        # raw HBM ref, written by DMA
            scratch_shapes=[pltpu.SemaphoreType.DMA],
        ),
        cost_estimate=pl.CostEstimate(
            flops=0, transcendentals=0, bytes_accessed=2 * nbytes),
    )(idx, *xs)


if __name__ == "__main__":
    key = jax.random.PRNGKey(0)
    k0, k1, k2 = jax.random.split(key, 3)

    shape = (2, 4, 16, 16)
    xs = [
        jax.random.normal(k0, shape, dtype=jnp.float32),
        jax.random.normal(k1, shape, dtype=jnp.float32),
        jax.random.normal(k2, shape, dtype=jnp.float32),
    ]

    # Static index (usual Index(index=...) case): pure list indexing, no kernel.
    out_static = index_select(xs, 1)
    assert out_static is xs[1]

    # Dynamic (on-device) index: exercises the Pallas DMA-select kernel.
    out = index_select(xs, jnp.int32(1))
    jax.block_until_ready(out)
    ref = xs[1]
    assert out.shape == ref.shape and out.dtype == ref.dtype
    assert bool(jnp.array_equal(out, ref)), "mismatch vs reference (index=1)"

    # Negative index (PyTorch allows xs[-1]); normalized host-side before prefetch.
    out_neg = index_select(xs, jnp.int32(-1))
    jax.block_until_ready(out_neg)
    assert bool(jnp.array_equal(out_neg, xs[-1])), "mismatch vs reference (index=-1)"

    print("KERNEL_OK")
</pallas_src>

<mosaic_0001>
module attributes {stable_mosaic.version = 11 : i64} {
  func.func @kernel(%arg0: i32, %arg1: memref<1xi32, #tpu.memory_space<smem>>, %arg2: memref<2x4x16x16xf32, #tpu.memory_space<any>>, %arg3: memref<2x4x16x16xf32, #tpu.memory_space<any>>, %arg4: memref<2x4x16x16xf32, #tpu.memory_space<any>>, %arg5: memref<2x4x16x16xf32, #tpu.memory_space<any>>, %arg6: memref<!tpu.dma_semaphore, #tpu.memory_space<semaphore_mem>>) attributes {dimension_semantics = [#tpu.dimension_semantics<arbitrary>], iteration_bounds = array<i64: 1>, scalar_prefetch = 1 : i64, scratch_operands = 1 : i64, tpu.core_type = #tpu.core_type<tc>, window_params = [{}, {}, {}, {}]} {
    %c0 = arith.constant 0 : index
    %0 = memref.load %arg1[%c0] : memref<1xi32, #tpu.memory_space<smem>>
    %c0_i32 = arith.constant 0 : i32
    %1 = arith.cmpi eq, %0, %c0_i32 : i32
    %2 = arith.extui %1 : i1 to i32
    %c0_i32_0 = arith.constant 0 : i32
    %3 = arith.cmpi ne, %2, %c0_i32_0 : i32
    scf.if %3 {
      tpu.enqueue_dma source(%arg2 : memref<2x4x16x16xf32, #tpu.memory_space<any>>) target(%arg5 : memref<2x4x16x16xf32, #tpu.memory_space<any>>) target_semaphore(%arg6 : memref<!tpu.dma_semaphore, #tpu.memory_space<semaphore_mem>>)
      tpu.wait_dma2 semaphore(%arg6 : memref<!tpu.dma_semaphore, #tpu.memory_space<semaphore_mem>>) src(%arg2 : memref<2x4x16x16xf32, #tpu.memory_space<any>>) dst(%arg5 : memref<2x4x16x16xf32, #tpu.memory_space<any>>)
    } else {
    }
    %c1_i32 = arith.constant 1 : i32
    %4 = arith.cmpi eq, %0, %c1_i32 : i32
    %5 = arith.extui %4 : i1 to i32
    %c0_i32_1 = arith.constant 0 : i32
    %6 = arith.cmpi ne, %5, %c0_i32_1 : i32
    scf.if %6 {
      tpu.enqueue_dma source(%arg3 : memref<2x4x16x16xf32, #tpu.memory_space<any>>) target(%arg5 : memref<2x4x16x16xf32, #tpu.memory_space<any>>) target_semaphore(%arg6 : memref<!tpu.dma_semaphore, #tpu.memory_space<semaphore_mem>>)
      tpu.wait_dma2 semaphore(%arg6 : memref<!tpu.dma_semaphore, #tpu.memory_space<semaphore_mem>>) src(%arg3 : memref<2x4x16x16xf32, #tpu.memory_space<any>>) dst(%arg5 : memref<2x4x16x16xf32, #tpu.memory_space<any>>)
    } else {
    }
    %c2_i32 = arith.constant 2 : i32
    %7 = arith.cmpi eq, %0, %c2_i32 : i32
    %8 = arith.extui %7 : i1 to i32
    %c0_i32_2 = arith.constant 0 : i32
    %9 = arith.cmpi ne, %8, %c0_i32_2 : i32
    scf.if %9 {
      tpu.enqueue_dma source(%arg4 : memref<2x4x16x16xf32, #tpu.memory_space<any>>) target(%arg5 : memref<2x4x16x16xf32, #tpu.memory_space<any>>) target_semaphore(%arg6 : memref<!tpu.dma_semaphore, #tpu.memory_space<semaphore_mem>>)
      tpu.wait_dma2 semaphore(%arg6 : memref<!tpu.dma_semaphore, #tpu.memory_space<semaphore_mem>>) src(%arg4 : memref<2x4x16x16xf32, #tpu.memory_space<any>>) dst(%arg5 : memref<2x4x16x16xf32, #tpu.memory_space<any>>)
    } else {
    }
    return
  }
}

</mosaic_0001>

<llo_original>
// kernel: tpu_custom_call.1
$region0: #{tpu_custom_call.1}
  #allocation0 [shape = 'u32[]', space=smem, size = 0x4, offset = 0x4, fixed_abs, tag = 'smem constant byte address 0x4 - core index']
  #allocation1 [shape = 'u32[72,128]{1,0:T(1,128)}', space=vmem, size = 0x9000, scoped, tag = 'internal scratch']
  #allocation2 [shape = 's32[1]{0}', space=sflag, size = 0x4, scoped, tag = 'scratch operand']
  #allocation3 [shape = 's32[1]{0}', space=sflag, size = 0x4, scoped, tag = 'scoped memory for tpu_custom_call.1']
  #allocation4 [shape = 's32[1]{0:T(128)S(6)}', space=smem, size = 0x200, scoped, tag = 'prefetched SMEM operand 0']
  #allocation5 [shape = 's32[]', space=sflag, size = 0x4, offset = 0, fixed_abs, tag = 'sflag constant byte address 0x0 - dummy sync flag']
  #allocation6 [shape = 'u32[0]{0}', space=smem, size = 0, offset = 0, fixed_abs, tag = 'smem constant byte address 0x0 - null']
  #allocation7 [shape = 's32[]', space=sflag, size = 0x4, offset = 0, fixed_abs, tag = 'sflag constant byte address 0x0 - dummy sync flag']
  #allocation8 [shape = 'u32[0]{0}', space=smem, size = 0, offset = 0, fixed_abs, tag = 'smem constant byte address 0x0 - null']
  #allocation9 [shape = 's32[]', space=sflag, size = 0x4, offset = 0, fixed_abs, tag = 'sflag constant byte address 0x0 - dummy sync flag']
  #allocation10 [shape = 'u32[0]{0}', space=smem, size = 0, offset = 0, fixed_abs, tag = 'smem constant byte address 0x0 - null']
  %s0 = inlined_call_operand.<no memory space> [shape: s32[1], index: 0, kind: input, shape index: {}]
  %s1 = inlined_call_operand.hbm [shape: f32[2,4,16,16], index: 1, kind: input, shape index: {}]
  %s2 = inlined_call_operand.hbm [shape: f32[2,4,16,16], index: 2, kind: input, shape index: {}]
  %s3 = inlined_call_operand.hbm [shape: f32[2,4,16,16], index: 3, kind: input, shape index: {}]
  %s4 = inlined_call_operand.hbm [shape: f32[2,4,16,16], index: 4, kind: output, shape index: {}]
  %s5 = sld [smem:[#allocation0]]
  $region14: #{tpu_custom_call.1} parent=0
    _
  %s7 = ssub.s32 1, %s5
  %s8 = scalar_select 0, %s7, %s5
  %9 = sst [smem:[#allocation4]] %s0
  %s10 = sld [smem:[#allocation4]]
  %p11 = scmp.eq.s32.totalorder %s10, 0
  // Predicated region
  $region2: #{tpu_custom_call.1} parent=0 // pred_check
    %p12 = pneg %p11
  $region3: #{tpu_custom_call.1} parent=0 // pred_check_branch
    %14 = sbr.rel (%p12) target = $region5
  $region4: #{tpu_custom_call.1} parent=0 // pred_region
    %s16 = sshll.u32 1, 14
    %s17 = sxor.u32 4294967295, %s16
    %s19 = sshll.u32 %s1, 4
    %s20 = int_to_ptr.hbm [resolvable:$true] %s19
    %s21 = sshll.u32 %s4, 4
    %s22 = int_to_ptr.hbm [resolvable:$true] %s21
    %25 = dma.general %s20, 2048, %s22, [#allocation2], [#allocation5], [#allocation6], 0, 0
    %s26 = smul.u32 2, 4
    %s27 = smul.u32 %s26, 16
    %s28 = smul.u32 %s27, 1
    %s29 = sshll.u32 %s28, 4
    %30 = dma.done [#allocation2], %s29
  $region5: #{tpu_custom_call.1} parent=0 // pred_fallthru
    _
  %p31 = scmp.eq.s32.totalorder %s10, 1
  // Predicated region
  $region6: #{tpu_custom_call.1} parent=0 // pred_check
    %p32 = pneg %p31
  $region7: #{tpu_custom_call.1} parent=0 // pred_check_branch
    %34 = sbr.rel (%p32) target = $region9
  $region8: #{tpu_custom_call.1} parent=0 // pred_region
    %s36 = sshll.u32 1, 14
    %s37 = sxor.u32 4294967295, %s36
    %s39 = sshll.u32 %s2, 4
    %s40 = int_to_ptr.hbm [resolvable:$true] %s39
    %s41 = sshll.u32 %s4, 4
    %s42 = int_to_ptr.hbm [resolvable:$true] %s41
    %45 = dma.general %s40, 2048, %s42, [#allocation2], [#allocation7], [#allocation8], 0, 0
    %s46 = smul.u32 2, 4
    %s47 = smul.u32 %s46, 16
    %s48 = smul.u32 %s47, 1
    %s49 = sshll.u32 %s48, 4
    %50 = dma.done [#allocation2], %s49
  $region9: #{tpu_custom_call.1} parent=0 // pred_fallthru
    _
  %p51 = scmp.eq.s32.totalorder %s10, 2
  // Predicated region
  $region10: #{tpu_custom_call.1} parent=0 // pred_check
    %p52 = pneg %p51
  $region11: #{tpu_custom_call.1} parent=0 // pred_check_branch
    %54 = sbr.rel (%p52) target = $region13
  $region12: #{tpu_custom_call.1} parent=0 // pred_region
    %s56 = sshll.u32 1, 14
    %s57 = sxor.u32 4294967295, %s56
    %s59 = sshll.u32 %s3, 4
    %s60 = int_to_ptr.hbm [resolvable:$true] %s59
    %s61 = sshll.u32 %s4, 4
    %s62 = int_to_ptr.hbm [resolvable:$true] %s61
    %65 = dma.general %s60, 2048, %s62, [#allocation2], [#allocation9], [#allocation10], 0, 0
    %s66 = smul.u32 2, 4
    %s67 = smul.u32 %s66, 16
    %s68 = smul.u32 %s67, 1
    %s69 = sshll.u32 %s68, 4
    %70 = dma.done [#allocation2], %s69
  $region13: #{tpu_custom_call.1} parent=0 // pred_fallthru
    _
  %71 = vsyncmov [#allocation2]
  %s72 = vpop.sfrf %71
  %p73 = scmp.eq.s32.totalorder %s72, 0
  %p74 = pneg %p73
  %76 = shalt.err (%p74)

</llo_original>
